<compile_context>
chip_gen: v5e
topology: v5e:2x2
jax: 0.10.0
libtpu: 0.0.40
codegen_flags: <defaults>
</compile_context>

<pallas_src>
import jax
import jax.numpy as jnp
from jax import lax
from jax.experimental import pallas as pl
from jax.experimental.pallas import tpu as pltpu


def _tpu_random_kernel(seed_ref, o_ref):
    """One grid step == one (TB, num_cols*C) row-block of the flattened output.

    seed_ref : SMEM int32[1, 1]   base seed
    o_ref    : VMEM float32[TB, num_cols*C]
    """
    # Per-block deterministic seed -> results independent of grid scheduling,
    # which lets the grid axis be "parallel" (megacore sharding on v7x).
    pltpu.prng_seed(seed_ref[0, 0] + pl.program_id(0))

    bits = pltpu.prng_random_bits(o_ref.shape)          # raw 32-bit random bits
    if bits.dtype != jnp.uint32:                        # only bitcast if needed
        bits = pltpu.bitcast(bits, jnp.uint32)
    # uniform [0, 1): keep 23 random mantissa bits, force exponent to 127
    # => float in [1, 2), then subtract 1.
    mant = (bits >> jnp.uint32(9)) | jnp.uint32(0x3F800000)
    o_ref[...] = pltpu.bitcast(mant, jnp.float32) - 1.0


def _bits_to_uniform_kernel(bits_ref, o_ref):
    """Interpret/CPU fallback: uint32 bits (precomputed) -> uniform [0, 1)."""
    bits = bits_ref[...]
    if bits.dtype != jnp.uint32:
        bits = lax.bitcast_convert_type(bits, jnp.uint32)
    mant = (bits >> jnp.uint32(9)) | jnp.uint32(0x3F800000)
    o_ref[...] = lax.bitcast_convert_type(mant, jnp.float32) - 1.0


def _row_tile(batch, feat):
    """Row-tile TB for the (batch, feat) flattened output.

    Keeps each output block <= ~4 MiB (double-buffered -> <= 8 MiB), comfortably
    under the 32 MiB default scoped-VMEM limit on v5e/v6e/v7x, while being far
    past the ~0.35 us/step overhead knee.  TB is a multiple of 8 unless it
    equals the full batch (full-extent blocks are always legal).
    """
    target_rows = max(8, (4 * 1024 * 1024) // max(1, feat * 4))
    tb = min(2048, target_rows)
    tb = max(8, (tb // 8) * 8)
    if tb >= batch:
        return batch
    return tb


def random_text_model_forward(input_ids, attention_mask, *, num_cols,
                              text_emb_channels, seed=0):
    """JAX/Pallas equivalent of RandomTextModel.forward.

    The original module densifies MultiNestedTensors with fill_value=0 and then
    ignores their values entirely; only the batch size matters.  So the dense
    inputs never enter the pallas_call (no dead HBM traffic).
    Returns float32 (B, num_cols, text_emb_channels) uniform in [0, 1).
    """
    del attention_mask  # read & discarded by the PyTorch forward as well
    batch = int(input_ids.shape[0])
    feat = num_cols * text_emb_channels

    tb = _row_tile(batch, feat)
    grid = (pl.cdiv(batch, tb),)
    out_shape = jax.ShapeDtypeStruct((batch, feat), jnp.float32)
    out_spec = pl.BlockSpec((tb, feat), lambda i: (i, 0))

    if jax.default_backend() == "tpu":
        seed_arr = jnp.asarray([[seed]], dtype=jnp.int32)
        flat = pl.pallas_call(
            _tpu_random_kernel,
            out_shape=out_shape,
            grid=grid,
            in_specs=[pl.BlockSpec(memory_space=pltpu.MemorySpace.SMEM)],
            out_specs=out_spec,
            compiler_params=pltpu.CompilerParams(
                # Per-block seeding is order independent -> shard across the
                # two TensorCores on v7x; harmless on single-TC v5e/v6e.
                dimension_semantics=("parallel",),
            ),
        )(seed_arr)
    else:
        # TODO(synk): pltpu.prng_seed / prng_random_bits have no interpret/CPU
        # lowering; off-TPU we feed jax.random bits and do only the
        # bits->uniform conversion inside the Pallas kernel.
        bits = jax.random.bits(jax.random.PRNGKey(seed), (batch, feat),
                               jnp.uint32)
        flat = pl.pallas_call(
            _bits_to_uniform_kernel,
            out_shape=out_shape,
            grid=grid,
            in_specs=[pl.BlockSpec((tb, feat), lambda i: (i, 0))],
            out_specs=out_spec,
        )(bits)

    return flat.reshape(batch, num_cols, text_emb_channels)


if __name__ == "__main__":
    # Module hyperparameters (from __init__): text_emb_channels, num_cols.
    text_emb_channels = 32
    num_cols = 4

    # Small deterministic example "tokenized" inputs: batch=2, seq=8.
    key = jax.random.PRNGKey(0)
    k_ids, k_mask = jax.random.split(key)
    B, S = 2, 8
    input_ids = jax.random.randint(k_ids, (B, S), 0, 100, dtype=jnp.int32)
    attention_mask = (jax.random.uniform(k_mask, (B, S)) > 0.3).astype(jnp.int32)

    out = random_text_model_forward(
        input_ids, attention_mask,
        num_cols=num_cols, text_emb_channels=text_emb_channels, seed=1234,
    )
    out = jax.block_until_ready(out)

    assert out.shape == (B, num_cols, text_emb_channels), out.shape
    assert out.dtype == jnp.float32, out.dtype
    assert bool(jnp.all(jnp.isfinite(out)))
    assert bool(jnp.all(out >= 0.0)) and bool(jnp.all(out < 1.0))

    print("KERNEL_OK")
</pallas_src>

<mosaic_0001>
module attributes {stable_mosaic.version = 11 : i64} {
  func.func @_bits_to_uniform_kernel(%arg0: i32, %arg1: memref<2x128xi32, #tpu.memory_space<vmem>>, %arg2: memref<2x128xf32, #tpu.memory_space<vmem>>) attributes {dimension_semantics = [#tpu.dimension_semantics<arbitrary>], iteration_bounds = array<i64: 1>, scalar_prefetch = 0 : i64, scratch_operands = 0 : i64, tpu.core_type = #tpu.core_type<tc>, window_params = [{transform_indices = @transform_0, window_bounds = array<i64: 2, 128>}, {transform_indices = @transform_1, window_bounds = array<i64: 2, 128>}]} {
    %c0 = arith.constant 0 : index
    %c0_0 = arith.constant 0 : index
    %0 = vector.load %arg1[%c0, %c0_0] : memref<2x128xi32, #tpu.memory_space<vmem>>, vector<2x128xi32>
    %c9_i32 = arith.constant 9 : i32
    %1 = vector.broadcast %c9_i32 : i32 to vector<2x128xi32>
    %2 = arith.shrui %0, %1 : vector<2x128xi32>
    %c1065353216_i32 = arith.constant 1065353216 : i32
    %3 = vector.broadcast %c1065353216_i32 : i32 to vector<2x128xi32>
    %4 = arith.ori %2, %3 : vector<2x128xi32>
    %5 = tpu.bitcast %4 : vector<2x128xi32> -> vector<2x128xf32>
    %cst = arith.constant 1.000000e+00 : f32
    %6 = vector.broadcast %cst : f32 to vector<2x128xf32>
    %7 = arith.subf %5, %6 : vector<2x128xf32>
    %c0_1 = arith.constant 0 : index
    %c0_2 = arith.constant 0 : index
    %8 = vector.load %arg2[%c0_1, %c0_2] : memref<2x128xf32, #tpu.memory_space<vmem>>, vector<2x128xf32>
    tpu.vector_store %arg2[%c0_1, %c0_2], %7 {strides = array<i32>} : memref<2x128xf32, #tpu.memory_space<vmem>>, vector<2x128xf32>,
    return
  }
  func.func @transform_0(%arg0: i32) -> (i32, i32) {
    %c0_i32 = arith.constant 0 : i32
    %c0_i32_0 = arith.constant 0 : i32
    return %arg0, %c0_i32 : i32, i32
  }
  func.func @transform_1(%arg0: i32) -> (i32, i32) {
    %c0_i32 = arith.constant 0 : i32
    %c0_i32_0 = arith.constant 0 : i32
    return %arg0, %c0_i32 : i32, i32
  }
}

</mosaic_0001>

<llo_original>
// kernel: tpu_custom_call.1
$region0: #{tpu_custom_call.1}
  #allocation0 [shape = 'u32[]', space=smem, size = 0x4, offset = 0x4, fixed_abs, tag = 'smem constant byte address 0x4 - core index']
  #allocation1 [shape = 'u32[72,128]{1,0:T(1,128)}', space=vmem, size = 0x9000, scoped, tag = 'internal scratch']
  %s0 = inlined_call_operand.hbm [shape: u32[2,128], index: 0, kind: input, shape index: {}]
  %s1 = inlined_call_operand.hbm [shape: f32[2,128], index: 1, kind: output, shape index: {}]
  %s2 = sld [smem:[#allocation0]]
  $region18: #{tpu_custom_call.1} parent=0
    _
  %s4 = ssub.s32 1, %s2
  %s5 = scalar_select 0, %s4, %s2
  $region1: #{tpu_custom_call.1} parent=0
    #allocation2 [shape = 'u8[1024]{0}', space=vmem, size = 0x400, scoped, tag = 'input window, operand 0, single buffered']
    #allocation3 [shape = 's32[1]{0}', space=sflag, size = 0x4, scoped, tag = 'scoped memory for tpu_custom_call.1']
    #allocation4 [shape = 's32[1]{0}', space=sflag, size = 0x4, scoped, tag = 'scoped memory for tpu_custom_call.1']
    #allocation5 [shape = 'u8[1024]{0}', space=vmem, size = 0x400, scoped, tag = 'output window, operand 0, single buffered']
    %6 = vsyncpa [#allocation3], 0
    %7 = vsyncpa [#allocation4], 0
    // Predicated region
    $region2: #{tpu_custom_call.1} parent=1 // pred_check
      _
    $region3: #{tpu_custom_call.1} parent=1 // pred_check_branch
      %9 = sbr.rel (0) target = $region5
    $region4: #{tpu_custom_call.1} parent=1 // pred_region
      %11 = vsyncadd [#allocation3], 0
      %s13 = sshll.u32 %s0, 4
      %s14 = int_to_ptr.hbm [resolvable:$true] %s13
      %s15 = sshll.u32 [#allocation2], 4
      %s16 = int_to_ptr.vmem [resolvable:$true] %s15
      %18 = dma.hbm_to_vmem [thread:$0]  %s14, 32, %s16, [#allocation3]
    $region5: #{tpu_custom_call.1} parent=1 // pred_fallthru
      _
    // Predicated region
    $region6: #{tpu_custom_call.1} parent=1 // pred_check
      _
    $region7: #{tpu_custom_call.1} parent=1 // pred_check_branch
      %20 = sbr.rel (0) target = $region9
    $region8: #{tpu_custom_call.1} parent=1 // pred_region
      %22 = dma.done [#allocation3], 32
    $region9: #{tpu_custom_call.1} parent=1 // pred_fallthru
      _
    %v23 = vld [vmem:[#allocation2] sm:$0x3]
    %v24 = vshrl.u32 %v23, 9
    %v25 = vor.u32 %v24, 1065353216
    %v27 = vsub.f32 %v25, 1.0
    %28 = vst [vmem:[#allocation5] sm:$0x3] %v27
    // Predicated region
    $region10: #{tpu_custom_call.1} parent=1 // pred_check
      _
    $region11: #{tpu_custom_call.1} parent=1 // pred_check_branch
      %30 = sbr.rel (0) target = $region13
    $region12: #{tpu_custom_call.1} parent=1 // pred_region
      %32 = vsyncadd [#allocation4], 0
      %s34 = sshll.u32 [#allocation5], 4
      %s35 = int_to_ptr.vmem [resolvable:$true] %s34
      %s36 = sshll.u32 %s1, 4
      %s37 = int_to_ptr.hbm [resolvable:$true] %s36
      %39 = dma.vmem_to_hbm [thread:$0]  %s35, 32, %s37, [#allocation4]
    $region13: #{tpu_custom_call.1} parent=1 // pred_fallthru
      _
    // Predicated region
    $region14: #{tpu_custom_call.1} parent=1 // pred_check
      _
    $region15: #{tpu_custom_call.1} parent=1 // pred_check_branch
      %41 = sbr.rel (0) target = $region17
    $region16: #{tpu_custom_call.1} parent=1 // pred_region
      %43 = dma.done [#allocation4], 32
    $region17: #{tpu_custom_call.1} parent=1 // pred_fallthru
      _
    %44 = vsyncpa [#allocation3], 1
    %45 = vsyncpa [#allocation4], 1

</llo_original>
